<compile_context>
chip_gen: v5e
topology: v5e:2x2
jax: 0.10.0
libtpu: 0.0.40
codegen_flags: <defaults>
</compile_context>

<pallas_src>
import functools
import math

import jax
import jax.numpy as jnp
from jax.experimental import pallas as pl
from jax.experimental.pallas import tpu as pltpu


def _wbce_dice_kernel(x_ref, t_ref, inter_ref, den_ref, bce_ref, *,
                      weight, valid_cols, tile_cols, needs_mask):
    j = pl.program_id(1)  # feature (reduction) axis -- last grid axis

    @pl.when(j == 0)
    def _init():
        inter_ref[...] = jnp.zeros_like(inter_ref)
        den_ref[...] = jnp.zeros_like(den_ref)
        bce_ref[...] = jnp.zeros_like(bce_ref)

    log_lo = math.log(1e-6)
    log_hi = math.log1p(-1e-6)

    def fold128(v):
        # Lane fold (bn, w) -> (bn, 128) using only 128-aligned full-vreg adds.
        w = v.shape[1]
        while w > 128:
            h = w // 2
            v = v[:, :h] + v[:, h:]
            w = h
        return v

    def contributions(x, t):
        # Shared transcendentals (1 exp + 1 log + 1 approx-recip per element):
        #   sigmoid(x)        = where(x>=0, r, 1-r),  r = 1/(1+exp(-|x|))
        #   log(sigmoid(x))   = min(x, 0)  - log(1+exp(-|x|))
        #   log(1-sigmoid(x)) = min(-x, 0) - log(1+exp(-|x|))
        e = jnp.exp(-jnp.abs(x))
        log1pe = jnp.log(1.0 + e)
        d = 1.0 + e
        r0 = pl.reciprocal(d, approx=True)
        r = r0 * (2.0 - d * r0)            # one Newton step -> ~f32 accuracy
        sig = jnp.where(x >= 0, r, 1.0 - r)
        # torch.clamp(p, eps, 1-eps) applied in log space (log is monotone).
        log_p = jnp.clip(jnp.minimum(x, 0.0) - log1pe, log_lo, log_hi)
        log_q = jnp.clip(jnp.minimum(-x, 0.0) - log1pe, log_lo, log_hi)
        tc = jnp.clip(t, 0.01, 0.99)       # wbce smooth = 0.01
        bce = -weight * tc * log_p - (1.0 - tc) * log_q
        # sigmoid is in (0,1) so abs(sig) dropped from the dice denominator.
        return sig * t, sig + jnp.abs(t), bce

    def accumulate(inter, den, bce):
        inter_ref[...] += fold128(inter)
        den_ref[...] += fold128(den)
        bce_ref[...] += fold128(bce)

    x_raw = x_ref[...].astype(jnp.float32)
    t_raw = t_ref[...].astype(jnp.float32)

    if needs_mask:
        last = pl.num_programs(1) - 1

        @pl.when(j < last)
        def _interior():                    # full tile: no mask overhead
            accumulate(*contributions(x_raw, t_raw))

        @pl.when(j == last)
        def _edge():                        # ragged tile: mask inputs first
            col = j * tile_cols + jax.lax.broadcasted_iota(
                jnp.int32, x_raw.shape, 1)
            valid = col < valid_cols
            m = valid.astype(jnp.float32)
            # Mask x/t BEFORE exp/log so garbage lanes can't produce NaNs,
            # then zero the per-element contributions of invalid lanes.
            xm = jnp.where(valid, x_raw, 0.0)
            tm_ = jnp.where(valid, t_raw, 0.0)
            inter, den, bce = contributions(xm, tm_)
            accumulate(inter * m, den * m, bce * m)
    else:
        accumulate(*contributions(x_raw, t_raw))


def _min_sublanes(dtype):
    # Sublane multiple required by dtype packing: 8 (32-bit), 16 (16-bit), 32 (8-bit).
    return max(8, 32 // jnp.dtype(dtype).itemsize)


def _tpu_vmem_bytes():
    try:
        info = pltpu.get_tpu_info()
        v = int(getattr(info, "vmem_capacity_bytes", 0))
        if v > 0:
            return v
    except Exception:
        pass
    return 64 * 1024 * 1024  # conservative default (v7x-sized); safe everywhere


def wbce_dice_loss(output, target, *, alpha=1.0, weight=1.0):
    """Pallas implementation of WBCE_DiceLoss.forward with reduction='mean',
    ignore_index=None, batch_dice=False. Accepts [N, *] tensors; returns scalar."""
    assert output.shape == target.shape
    n = output.shape[0]
    m = 1
    for d in output.shape[1:]:
        m *= d

    # Sublane folding: [N, M] -> [N*F, M/F] so small batches fill all 8 sublanes.
    fold = 1
    if n % 8 != 0:
        for f in (8, 4, 2):
            if m % f == 0:
                fold = f
                break
    rows = n * fold
    mf = m // fold

    # No host-side dtype casts / pads: inputs go to the kernel as-is.
    x2 = output.reshape(rows, mf)
    t2 = target.reshape(rows, mf)

    xb = jnp.dtype(x2.dtype).itemsize
    tb = jnp.dtype(t2.dtype).itemsize
    req = max(_min_sublanes(x2.dtype), _min_sublanes(t2.dtype))

    # Generation-aware VMEM budget.
    vmem_cap = _tpu_vmem_bytes()
    multi_tc = vmem_cap <= 64 * 1024 * 1024          # v7x: 64 MiB/TC, 2 TCs/chip
    vmem_limit = max(32 * 1024 * 1024, (vmem_cap * 3) // 4)   # 96 MiB / 48 MiB
    budget = vmem_limit - 8 * 1024 * 1024            # headroom for outputs etc.
    # Per-element bytes: 2x double-buffered inputs + ~8 f32 compute temporaries.
    per_elem = 2 * (xb + tb) + 8 * 4

    # Row blocking.
    if rows % req != 0:
        bn = rows  # ragged row count: single full-height block
        # TODO(synk): pad/mask rows to a sublane multiple so v7x keeps both TCs busy here.
    else:
        cap_rows = max(req, budget // (per_elem * 128))
        if multi_tc and rows >= 2 * req:
            # keep >= 2 row blocks so the "parallel" axis splits across TCs
            want = rows // 2 if (rows % 2 == 0 and (rows // 2) % req == 0) else req
        else:
            want = rows        # single-TC: one row block, fewest grid steps
        bn = max(req, (min(want, cap_rows) // req) * req)
        while rows % bn != 0:
            bn -= req

    # Feature tile: largest power-of-two multiple of 128 fitting the budget.
    tm_max = max(128, budget // (bn * per_elem))
    tm_cover = 128
    while tm_cover < mf:
        tm_cover *= 2
    tm = 128
    while tm * 2 <= min(tm_max, tm_cover, 131072):
        tm *= 2

    nj = pl.cdiv(mf, tm)
    needs_mask = (mf % tm) != 0
    grid = (rows // bn, nj)

    kernel = functools.partial(
        _wbce_dice_kernel,
        weight=float(weight),
        valid_cols=mf,
        tile_cols=tm,
        needs_mask=needs_mask,
    )

    acc_shape = jax.ShapeDtypeStruct((rows, 128), jnp.float32)
    inter, den, bce = pl.pallas_call(
        kernel,
        out_shape=(acc_shape, acc_shape, acc_shape),
        grid_spec=pltpu.PrefetchScalarGridSpec(
            num_scalar_prefetch=0,
            grid=grid,
            in_specs=[
                pl.BlockSpec((bn, tm), lambda i, j: (i, j)),
                pl.BlockSpec((bn, tm), lambda i, j: (i, j)),
            ],
            out_specs=(
                pl.BlockSpec((bn, 128), lambda i, j: (i, 0)),
                pl.BlockSpec((bn, 128), lambda i, j: (i, 0)),
                pl.BlockSpec((bn, 128), lambda i, j: (i, 0)),
            ),
        ),
        compiler_params=pltpu.CompilerParams(
            dimension_semantics=("parallel", "arbitrary"),
            vmem_limit_bytes=int(vmem_limit),
        ),
    )(x2, t2)

    # Tiny O(rows*128) scalar combine outside the kernel.
    inter_s = inter.reshape(n, -1).sum(axis=1)       # per-sample dice sums
    den_s = den.reshape(n, -1).sum(axis=1)
    dice_smooth = 1.0
    dice_per_sample = 1.0 - (2.0 * inter_s + dice_smooth) / (den_s + dice_smooth)
    dice_loss = -jnp.log(1.0 - jnp.mean(dice_per_sample))
    wbce_loss = jnp.sum(bce) / float(n * m)
    return alpha * wbce_loss + dice_loss


def _reference(output, target, alpha=1.0, weight=1.0):
    # Pure-JAX reference mirroring the PyTorch forward (for sanity only).
    n = output.shape[0]
    x = output.reshape(n, -1).astype(jnp.float32)
    t = target.reshape(n, -1).astype(jnp.float32)
    sig = jax.nn.sigmoid(x)
    num = 2.0 * jnp.sum(sig * t, axis=1) + 1.0
    den = jnp.sum(jnp.abs(sig) + jnp.abs(t), axis=1) + 1.0
    dice = jnp.mean(1.0 - num / den)
    dice_loss = -jnp.log(1.0 - dice)
    p = jnp.clip(sig, 1e-6, 1.0 - 1e-6)
    tc = jnp.clip(t, 0.01, 0.99)
    wbce = jnp.mean(-weight * tc * jnp.log(p) - (1.0 - tc) * jnp.log(1.0 - p))
    return alpha * wbce + dice_loss


if __name__ == "__main__":
    key = jax.random.PRNGKey(0)
    k1, k2 = jax.random.split(key)
    # NCHW logits and binary targets.
    x = jax.random.normal(k1, (2, 4, 16, 16), dtype=jnp.float32)
    t = (jax.random.uniform(k2, (2, 4, 16, 16)) > 0.5).astype(jnp.float32)

    loss = wbce_dice_loss(x, t, alpha=1.0, weight=1.0)
    loss = jax.block_until_ready(loss)

    ref = _reference(x, t)
    assert jnp.allclose(loss, ref, rtol=1e-4, atol=1e-5), (loss, ref)
    print("KERNEL_OK")
</pallas_src>

<mosaic_0001>
module attributes {stable_mosaic.version = 11 : i64} {
  func.func @_wbce_dice_kernel(%arg0: i32, %arg1: i32, %arg2: memref<8x128xf32, #tpu.memory_space<vmem>>, %arg3: memref<8x128xf32, #tpu.memory_space<vmem>>, %arg4: memref<8x128xf32, #tpu.memory_space<vmem>>, %arg5: memref<8x128xf32, #tpu.memory_space<vmem>>, %arg6: memref<8x128xf32, #tpu.memory_space<vmem>>) attributes {dimension_semantics = [#tpu.dimension_semantics<parallel>, #tpu.dimension_semantics<arbitrary>], iteration_bounds = array<i64: 2, 1>, scalar_prefetch = 0 : i64, scratch_operands = 0 : i64, tpu.core_type = #tpu.core_type<tc>, window_params = [{transform_indices = @transform_0, window_bounds = array<i64: 8, 128>}, {transform_indices = @transform_1, window_bounds = array<i64: 8, 128>}, {transform_indices = @transform_2, window_bounds = array<i64: 8, 128>}, {transform_indices = @transform_3, window_bounds = array<i64: 8, 128>}, {transform_indices = @transform_4, window_bounds = array<i64: 8, 128>}]} {
    %c0_i32 = arith.constant 0 : i32
    %0 = arith.cmpi eq, %arg1, %c0_i32 : i32
    %1 = arith.extui %0 : i1 to i32
    %c0_i32_0 = arith.constant 0 : i32
    %2 = arith.cmpi ne, %1, %c0_i32_0 : i32
    scf.if %2 {
      %cst_32 = arith.constant 0.000000e+00 : f32
      %63 = vector.broadcast %cst_32 : f32 to vector<8x128xf32>
      %c0_33 = arith.constant 0 : index
      %c0_34 = arith.constant 0 : index
      %64 = vector.load %arg4[%c0_33, %c0_34] : memref<8x128xf32, #tpu.memory_space<vmem>>, vector<8x128xf32>
      tpu.vector_store %arg4[%c0_33, %c0_34], %63 {strides = array<i32>} : memref<8x128xf32, #tpu.memory_space<vmem>>, vector<8x128xf32>,
      %cst_35 = arith.constant 0.000000e+00 : f32
      %65 = vector.broadcast %cst_35 : f32 to vector<8x128xf32>
      %c0_36 = arith.constant 0 : index
      %c0_37 = arith.constant 0 : index
      %66 = vector.load %arg5[%c0_36, %c0_37] : memref<8x128xf32, #tpu.memory_space<vmem>>, vector<8x128xf32>
      tpu.vector_store %arg5[%c0_36, %c0_37], %65 {strides = array<i32>} : memref<8x128xf32, #tpu.memory_space<vmem>>, vector<8x128xf32>,
      %cst_38 = arith.constant 0.000000e+00 : f32
      %67 = vector.broadcast %cst_38 : f32 to vector<8x128xf32>
      %c0_39 = arith.constant 0 : index
      %c0_40 = arith.constant 0 : index
      %68 = vector.load %arg6[%c0_39, %c0_40] : memref<8x128xf32, #tpu.memory_space<vmem>>, vector<8x128xf32>
      tpu.vector_store %arg6[%c0_39, %c0_40], %67 {strides = array<i32>} : memref<8x128xf32, #tpu.memory_space<vmem>>, vector<8x128xf32>,
    } else {
    }
    %c0 = arith.constant 0 : index
    %c0_1 = arith.constant 0 : index
    %3 = vector.load %arg2[%c0, %c0_1] : memref<8x128xf32, #tpu.memory_space<vmem>>, vector<8x128xf32>
    %c0_2 = arith.constant 0 : index
    %c0_3 = arith.constant 0 : index
    %4 = vector.load %arg3[%c0_2, %c0_3] : memref<8x128xf32, #tpu.memory_space<vmem>>, vector<8x128xf32>
    %5 = math.absf %3 : vector<8x128xf32>
    %cst = arith.constant 0.000000e+00 : f32
    %6 = vector.broadcast %cst : f32 to vector<8x128xf32>
    %7 = arith.subf %6, %5 : vector<8x128xf32>
    %8 = math.exp %7 : vector<8x128xf32>
    %cst_4 = arith.constant 1.000000e+00 : f32
    %9 = vector.broadcast %cst_4 : f32 to vector<8x128xf32>
    %10 = arith.addf %9, %8 : vector<8x128xf32>
    %11 = math.log %10 : vector<8x128xf32>
    %cst_5 = arith.constant 1.000000e+00 : f32
    %12 = vector.broadcast %cst_5 : f32 to vector<8x128xf32>
    %13 = arith.addf %12, %8 : vector<8x128xf32>
    %14 = tpu.reciprocal %13 {approx = true} : vector<8x128xf32> -> vector<8x128xf32>
    %15 = arith.mulf %13, %14 : vector<8x128xf32>
    %cst_6 = arith.constant 2.000000e+00 : f32
    %16 = vector.broadcast %cst_6 : f32 to vector<8x128xf32>
    %17 = arith.subf %16, %15 : vector<8x128xf32>
    %18 = arith.mulf %14, %17 : vector<8x128xf32>
    %cst_7 = arith.constant 0.000000e+00 : f32
    %19 = vector.broadcast %cst_7 : f32 to vector<8x128xf32>
    %20 = arith.cmpf oge, %3, %19 : vector<8x128xf32>
    %cst_8 = arith.constant 1.000000e+00 : f32
    %21 = vector.broadcast %cst_8 : f32 to vector<8x128xf32>
    %22 = arith.subf %21, %18 : vector<8x128xf32>
    %23 = arith.select %20, %18, %22 : vector<8x128xi1>, vector<8x128xf32>
    %cst_9 = arith.constant 0.000000e+00 : f32
    %24 = vector.broadcast %cst_9 : f32 to vector<8x128xf32>
    %25 = arith.minimumf %3, %24 : vector<8x128xf32>
    %26 = arith.subf %25, %11 : vector<8x128xf32>
    %cst_10 = arith.constant -13.8155107 : f32
    %cst_11 = arith.constant -1.00000045E-6 : f32
    %27 = vector.broadcast %cst_10 : f32 to vector<8x128xf32>
    %28 = arith.maximumf %27, %26 : vector<8x128xf32>
    %29 = vector.broadcast %cst_11 : f32 to vector<8x128xf32>
    %30 = arith.minimumf %29, %28 : vector<8x128xf32>
    %cst_12 = arith.constant 0.000000e+00 : f32
    %31 = vector.broadcast %cst_12 : f32 to vector<8x128xf32>
    %32 = arith.subf %31, %3 : vector<8x128xf32>
    %cst_13 = arith.constant 0.000000e+00 : f32
    %33 = vector.broadcast %cst_13 : f32 to vector<8x128xf32>
    %34 = arith.minimumf %32, %33 : vector<8x128xf32>
    %35 = arith.subf %34, %11 : vector<8x128xf32>
    %cst_14 = arith.constant -13.8155107 : f32
    %cst_15 = arith.constant -1.00000045E-6 : f32
    %36 = vector.broadcast %cst_14 : f32 to vector<8x128xf32>
    %37 = arith.maximumf %36, %35 : vector<8x128xf32>
    %38 = vector.broadcast %cst_15 : f32 to vector<8x128xf32>
    %39 = arith.minimumf %38, %37 : vector<8x128xf32>
    %cst_16 = arith.constant 0.00999999977 : f32
    %cst_17 = arith.constant 9.900000e-01 : f32
    %40 = vector.broadcast %cst_16 : f32 to vector<8x128xf32>
    %41 = arith.maximumf %40, %4 : vector<8x128xf32>
    %42 = vector.broadcast %cst_17 : f32 to vector<8x128xf32>
    %43 = arith.minimumf %42, %41 : vector<8x128xf32>
    %cst_18 = arith.constant -1.000000e+00 : f32
    %44 = vector.broadcast %cst_18 : f32 to vector<8x128xf32>
    %45 = arith.mulf %44, %43 : vector<8x128xf32>
    %46 = arith.mulf %45, %30 : vector<8x128xf32>
    %cst_19 = arith.constant 1.000000e+00 : f32
    %47 = vector.broadcast %cst_19 : f32 to vector<8x128xf32>
    %48 = arith.subf %47, %43 : vector<8x128xf32>
    %49 = arith.mulf %48, %39 : vector<8x128xf32>
    %50 = arith.subf %46, %49 : vector<8x128xf32>
    %51 = arith.mulf %23, %4 : vector<8x128xf32>
    %52 = math.absf %4 : vector<8x128xf32>
    %53 = arith.addf %23, %52 : vector<8x128xf32>
    %c0_20 = arith.constant 0 : index
    %c0_21 = arith.constant 0 : index
    %54 = vector.load %arg4[%c0_20, %c0_21] : memref<8x128xf32, #tpu.memory_space<vmem>>, vector<8x128xf32>
    %55 = arith.addf %54, %51 : vector<8x128xf32>
    %c0_22 = arith.constant 0 : index
    %c0_23 = arith.constant 0 : index
    %56 = vector.load %arg4[%c0_22, %c0_23] : memref<8x128xf32, #tpu.memory_space<vmem>>, vector<8x128xf32>
    tpu.vector_store %arg4[%c0_22, %c0_23], %55 {strides = array<i32>} : memref<8x128xf32, #tpu.memory_space<vmem>>, vector<8x128xf32>,
    %c0_24 = arith.constant 0 : index
    %c0_25 = arith.constant 0 : index
    %57 = vector.load %arg5[%c0_24, %c0_25] : memref<8x128xf32, #tpu.memory_space<vmem>>, vector<8x128xf32>
    %58 = arith.addf %57, %53 : vector<8x128xf32>
    %c0_26 = arith.constant 0 : index
    %c0_27 = arith.constant 0 : index
    %59 = vector.load %arg5[%c0_26, %c0_27] : memref<8x128xf32, #tpu.memory_space<vmem>>, vector<8x128xf32>
    tpu.vector_store %arg5[%c0_26, %c0_27], %58 {strides = array<i32>} : memref<8x128xf32, #tpu.memory_space<vmem>>, vector<8x128xf32>,
    %c0_28 = arith.constant 0 : index
    %c0_29 = arith.constant 0 : index
    %60 = vector.load %arg6[%c0_28, %c0_29] : memref<8x128xf32, #tpu.memory_space<vmem>>, vector<8x128xf32>
    %61 = arith.addf %60, %50 : vector<8x128xf32>
    %c0_30 = arith.constant 0 : index
    %c0_31 = arith.constant 0 : index
    %62 = vector.load %arg6[%c0_30, %c0_31] : memref<8x128xf32, #tpu.memory_space<vmem>>, vector<8x128xf32>
    tpu.vector_store %arg6[%c0_30, %c0_31], %61 {strides = array<i32>} : memref<8x128xf32, #tpu.memory_space<vmem>>, vector<8x128xf32>,
    return
  }
  func.func @transform_0(%arg0: i32, %arg1: i32) -> (i32, i32) {
    %c0_i32 = arith.constant 0 : i32
    return %arg0, %arg1 : i32, i32
  }
  func.func @transform_1(%arg0: i32, %arg1: i32) -> (i32, i32) {
    %c0_i32 = arith.constant 0 : i32
    return %arg0, %arg1 : i32, i32
  }
  func.func @transform_2(%arg0: i32, %arg1: i32) -> (i32, i32) {
    %c0_i32 = arith.constant 0 : i32
    %c0_i32_0 = arith.constant 0 : i32
    return %arg0, %c0_i32 : i32, i32
  }
  func.func @transform_3(%arg0: i32, %arg1: i32) -> (i32, i32) {
    %c0_i32 = arith.constant 0 : i32
    %c0_i32_0 = arith.constant 0 : i32
    return %arg0, %c0_i32 : i32, i32
  }
  func.func @transform_4(%arg0: i32, %arg1: i32) -> (i32, i32) {
    %c0_i32 = arith.constant 0 : i32
    %c0_i32_0 = arith.constant 0 : i32
    return %arg0, %c0_i32 : i32, i32
  }
}

</mosaic_0001>

<llo_original>
// kernel: tpu_custom_call.1
$region0: #{tpu_custom_call.1}
  #allocation0 [shape = 'u32[]', space=smem, size = 0x4, offset = 0x4, fixed_abs, tag = 'smem constant byte address 0x4 - core index']
  #allocation1 [shape = 'u32[72,128]{1,0:T(1,128)}', space=vmem, size = 0x9000, scoped, tag = 'internal scratch']
  %s0 = inlined_call_operand.hbm [shape: f32[16,128], index: 0, kind: input, shape index: {}]
  %s1 = inlined_call_operand.hbm [shape: f32[16,128], index: 1, kind: input, shape index: {}]
  %s2 = inlined_call_operand.hbm [shape: f32[16,128], index: 2, kind: output, shape index: {0}]
  %s3 = inlined_call_operand.hbm [shape: f32[16,128], index: 3, kind: output, shape index: {1}]
  %s4 = inlined_call_operand.hbm [shape: f32[16,128], index: 4, kind: output, shape index: {2}]
  %5 = xla_tuple %s2, %s3, %s4
  %s6 = sld [smem:[#allocation0]]
  $region69: #{tpu_custom_call.1} parent=0
    _
  %s8 = ssub.s32 1, %s6
  %s9 = scalar_select 0, %s8, %s6
  $region1: #{tpu_custom_call.1} parent=0
    #allocation2 [shape = 'u8[8192]{0}', space=vmem, size = 0x2000, scoped, tag = 'input window, operand 0']
    #allocation3 [shape = 's32[2]{0}', space=sflag, size = 0x8, scoped, tag = 'scoped memory for tpu_custom_call.1']
    #allocation4 [shape = 's32[2]{0}', space=sflag, size = 0x8, scoped, tag = 'scoped memory for tpu_custom_call.1']
    #allocation5 [shape = 'u8[8192]{0}', space=vmem, size = 0x2000, scoped, tag = 'input window, operand 1']
    #allocation6 [shape = 's32[2]{0}', space=sflag, size = 0x8, scoped, tag = 'scoped memory for tpu_custom_call.1']
    #allocation7 [shape = 'u8[8192]{0}', space=vmem, size = 0x2000, scoped, tag = 'output window, operand 0']
    #allocation8 [shape = 'u8[8192]{0}', space=vmem, size = 0x2000, scoped, tag = 'output window, operand 1']
    #allocation9 [shape = 's32[2]{0}', space=sflag, size = 0x8, scoped, tag = 'scoped memory for tpu_custom_call.1']
    #allocation10 [shape = 'u8[8192]{0}', space=vmem, size = 0x2000, scoped, tag = 'output window, operand 2']
    %10 = vsyncpa [#allocation3], 0
    %s11 = scalar_lea.sflag [#allocation3], 1
    %12 = vsyncpa %s11, 0
    %13 = vsyncpa [#allocation6], 0
    %s14 = scalar_lea.sflag [#allocation6], 1
    %15 = vsyncpa %s14, 0
    %16 = vsyncpa [#allocation4], 0
    %s17 = scalar_lea.sflag [#allocation4], 1
    %18 = vsyncpa %s17, 0
    %19 = vsyncpa [#allocation9], 0
    %s20 = scalar_lea.sflag [#allocation9], 1
    %21 = vsyncpa %s20, 0
    loop: start=0, step=1, limit=4
    $region2: #{tpu_custom_call.1} parent=1 // loop_pre_header
      _
    $region3: #{tpu_custom_call.1} parent=1 // loop_header
      %s23 = sphi 0, %s27
      %p24 = scmp.ge.s32.totalorder %s23, 4
      %s30 = sphi 0, %s42
      %s31 = sphi 0, %s38
      %s32 = sphi 0, %s30
      %s33 = sphi 0, %s31
      %s34 = sphi 0, %s32
      %s35 = sphi 0, %s33
      %s47 = sphi 0, %s49
      %s50 = sphi 0, %s47
      %s51 = sphi 0, %s50
      %s67 = sphi 0, %s51
      %s75 = sphi 0, %s77
      %s78 = sphi 0, %s75
      %s79 = sphi 0, %s78
      %s95 = sphi 0, %s79
      %s101 = sphi 0, %s103
      %s104 = sphi 0, %s101
      %s105 = sphi 0, %s104
      %s121 = sphi 0, %s105
      %s127 = sphi 0, %s129
      %s130 = sphi 0, %s127
      %s131 = sphi 0, %s130
      %s147 = sphi 0, %s131
      %s153 = sphi 0, %s155
      %s156 = sphi 0, %s153
      %s157 = sphi 0, %s156
      %s173 = sphi 0, %s157
    $region4: #{tpu_custom_call.1} parent=1 // loop_header_branch
      %26 = sbr.rel (%p24) target = $region8
    $region5: #{tpu_custom_call.1} parent=1 // loop_body
      %s28 = ssub.s32 %s23, 1
      %s29 = ssub.s32 %s23, 2
      %s36 = sadd.s32 1, %s31
      %p37 = scmp.ge.s32.totalorder %s36, 1
      %s38 = scalar_select %p37, 0, %s36
      %s39 = sadd.s32 1, %s30
      %s40 = scalar_select %p37, %s39, %s30
      %p41 = scmp.ge.s32.totalorder %s40, 2
      %s42 = scalar_select %p41, 0, %s40
      %s43 = ssub.s32 %s30, %s42
      %s44 = ssub.s32 %s31, %s38
      %s45 = sor.u32 %s43, %s44
      %p46 = scmp.eq.s32.totalorder %s45, 0
      %s48 = sadd.s32 %s47, 1
      %s49 = scalar_select %p46, %s47, %s48
      %p52 = pneg %p46
      %p53 = scmp.eq.s32.totalorder %s23, 1
      %p54 = por %p52, %p53
      %p55 = scmp.ne.s32.totalorder %s47, %s50
      %p56 = scmp.eq.s32.totalorder %s23, 0
      %p57 = por %p55, %p56
      %p58 = scmp.ne.s32.totalorder %s47, %s50
      %p59 = scmp.eq.s32.totalorder %s28, 1
      %p60 = por %p58, %p59
      %p61 = scmp.ne.s32.totalorder %s50, %s51
      %p62 = scmp.eq.s32.totalorder %s28, 0
      %p63 = por %p61, %p62
      %p64 = scmp.ne.s32.totalorder %s50, %s51
      %p65 = scmp.eq.s32.totalorder %s29, 1
      %p66 = por %p64, %p65
      %p68 = scmp.ne.s32.totalorder %s51, %s67
      %p69 = scmp.eq.s32.totalorder %s29, 0
      %p70 = por %p68, %p69
      %s71 = ssub.s32 %s30, %s42
      %s72 = ssub.s32 %s31, %s38
      %s73 = sor.u32 %s71, %s72
      %p74 = scmp.eq.s32.totalorder %s73, 0
      %s76 = sadd.s32 %s75, 1
      %s77 = scalar_select %p74, %s75, %s76
      %p80 = pneg %p74
      %p81 = scmp.eq.s32.totalorder %s23, 1
      %p82 = por %p80, %p81
      %p83 = scmp.ne.s32.totalorder %s75, %s78
      %p84 = scmp.eq.s32.totalorder %s23, 0
      %p85 = por %p83, %p84
      %p86 = scmp.ne.s32.totalorder %s75, %s78
      %p87 = scmp.eq.s32.totalorder %s28, 1
      %p88 = por %p86, %p87
      %p89 = scmp.ne.s32.totalorder %s78, %s79
      %p90 = scmp.eq.s32.totalorder %s28, 0
      %p91 = por %p89, %p90
      %p92 = scmp.ne.s32.totalorder %s78, %s79
      %p93 = scmp.eq.s32.totalorder %s29, 1
      %p94 = por %p92, %p93
      %p96 = scmp.ne.s32.totalorder %s79, %s95
      %p97 = scmp.eq.s32.totalorder %s29, 0
      %p98 = por %p96, %p97
      %s99 = ssub.s32 %s30, %s42
      %p100 = scmp.eq.s32.totalorder %s99, 0
      %s102 = sadd.s32 %s101, 1
      %s103 = scalar_select %p100, %s101, %s102
      %p106 = pneg %p100
      %p107 = scmp.eq.s32.totalorder %s23, 1
      %p108 = por %p106, %p107
      %p109 = scmp.ne.s32.totalorder %s101, %s104
      %p110 = scmp.eq.s32.totalorder %s23, 0
      %p111 = por %p109, %p110
      %p112 = scmp.ne.s32.totalorder %s101, %s104
      %p113 = scmp.eq.s32.totalorder %s28, 1
      %p114 = por %p112, %p113
      %p115 = scmp.ne.s32.totalorder %s104, %s105
      %p116 = scmp.eq.s32.totalorder %s28, 0
      %p117 = por %p115, %p116
      %p118 = scmp.ne.s32.totalorder %s104, %s105
      %p119 = scmp.eq.s32.totalorder %s29, 1
      %p120 = por %p118, %p119
      %p122 = scmp.ne.s32.totalorder %s105, %s121
      %p123 = scmp.eq.s32.totalorder %s29, 0
      %p124 = por %p122, %p123
      %s125 = ssub.s32 %s30, %s42
      %p126 = scmp.eq.s32.totalorder %s125, 0
      %s128 = sadd.s32 %s127, 1
      %s129 = scalar_select %p126, %s127, %s128
      %p132 = pneg %p126
      %p133 = scmp.eq.s32.totalorder %s23, 1
      %p134 = por %p132, %p133
      %p135 = scmp.ne.s32.totalorder %s127, %s130
      %p136 = scmp.eq.s32.totalorder %s23, 0
      %p137 = por %p135, %p136
      %p138 = scmp.ne.s32.totalorder %s127, %s130
      %p139 = scmp.eq.s32.totalorder %s28, 1
      %p140 = por %p138, %p139
      %p141 = scmp.ne.s32.totalorder %s130, %s131
      %p142 = scmp.eq.s32.totalorder %s28, 0
      %p143 = por %p141, %p142
      %p144 = scmp.ne.s32.totalorder %s130, %s131
      %p145 = scmp.eq.s32.totalorder %s29, 1
      %p146 = por %p144, %p145
      %p148 = scmp.ne.s32.totalorder %s131, %s147
      %p149 = scmp.eq.s32.totalorder %s29, 0
      %p150 = por %p148, %p149
      %s151 = ssub.s32 %s30, %s42
      %p152 = scmp.eq.s32.totalorder %s151, 0
      %s154 = sadd.s32 %s153, 1
      %s155 = scalar_select %p152, %s153, %s154
      %p158 = pneg %p152
      %p159 = scmp.eq.s32.totalorder %s23, 1
      %p160 = por %p158, %p159
      %p161 = scmp.ne.s32.totalorder %s153, %s156
      %p162 = scmp.eq.s32.totalorder %s23, 0
      %p163 = por %p161, %p162
      %p164 = scmp.ne.s32.totalorder %s153, %s156
      %p165 = scmp.eq.s32.totalorder %s28, 1
      %p166 = por %p164, %p165
      %p167 = scmp.ne.s32.totalorder %s156, %s157
      %p168 = scmp.eq.s32.totalorder %s28, 0
      %p169 = por %p167, %p168
      %p170 = scmp.ne.s32.totalorder %s156, %s157
      %p171 = scmp.eq.s32.totalorder %s29, 1
      %p172 = por %p170, %p171
      %p174 = scmp.ne.s32.totalorder %s157, %s173
      %p175 = scmp.eq.s32.totalorder %s29, 0
      %p176 = por %p174, %p175
      %p177 = scmp.le.s32.totalorder 1, %s23
      %p178 = scmp.lt.s32.totalorder %s23, 3
      %p179 = pnand %p177, %p178
      %p180 = pneg %p179
      // Predicated region
      $region9: #{tpu_custom_call.1} parent=5 // pred_check
        _
      $region10: #{tpu_custom_call.1} parent=5 // pred_check_branch
        %182 = sbr.rel (%p179) target = $region12
      $region11: #{tpu_custom_call.1} parent=5 // pred_region
        %s183 = ssub.s32 %s23, 1
      $region12: #{tpu_custom_call.1} parent=5 // pred_fallthru
        _
      %p184 = scmp.lt.s32.totalorder %s23, 2
      // Predicated region
      $region13: #{tpu_custom_call.1} parent=5 // pred_check
        %p185 = pneg %p184
      $region14: #{tpu_custom_call.1} parent=5 // pred_check_branch
        %187 = sbr.rel (%p185) target = $region16
      $region15: #{tpu_custom_call.1} parent=5 // pred_region
        // Predicated region
        $region17: #{tpu_custom_call.1} parent=15 // pred_check
          %p188 = pneg %p57
        $region18: #{tpu_custom_call.1} parent=15 // pred_check_branch
          %190 = sbr.rel (%p188) target = $region20
        $region19: #{tpu_custom_call.1} parent=15 // pred_region
          %s191 = sand.u32 %s47, 1
          %s192 = scalar_lea.sflag [#allocation3], %s191
          %s193 = sand.u32 %s47, 1
          %s194 = smul.addr %s193, 8
          %s195 = scalar_lea.vmem [#allocation2], %s194
          %197 = vsyncadd %s192, 0
          %s198 = sadd.s32 %s31, %s30
          %s199 = smul.addr %s198, 8
          %s200 = scalar_lea.hbm %s0, %s199
          %s202 = sshll.u32 %s200, 4
          %s203 = int_to_ptr.hbm [resolvable:$true] %s202
          %s204 = sshll.u32 %s195, 4
          %s205 = int_to_ptr.vmem [resolvable:$true] %s204
          %207 = dma.hbm_to_vmem [thread:$0]  %s203, 128, %s205, %s192
        $region20: #{tpu_custom_call.1} parent=15 // pred_fallthru
          _
        // Predicated region
        $region21: #{tpu_custom_call.1} parent=15 // pred_check
          %p208 = pneg %p85
        $region22: #{tpu_custom_call.1} parent=15 // pred_check_branch
          %210 = sbr.rel (%p208) target = $region24
        $region23: #{tpu_custom_call.1} parent=15 // pred_region
          %s211 = sand.u32 %s75, 1
          %s212 = scalar_lea.sflag [#allocation6], %s211
          %s213 = sand.u32 %s75, 1
          %s214 = smul.addr %s213, 8
          %s215 = scalar_lea.vmem [#allocation5], %s214
          %217 = vsyncadd %s212, 0
          %s218 = sadd.s32 %s31, %s30
          %s219 = smul.addr %s218, 8
          %s220 = scalar_lea.hbm %s1, %s219
          %s222 = sshll.u32 %s220, 4
          %s223 = int_to_ptr.hbm [resolvable:$true] %s222
          %s224 = sshll.u32 %s215, 4
          %s225 = int_to_ptr.vmem [resolvable:$true] %s224
          %227 = dma.hbm_to_vmem [thread:$0]  %s223, 128, %s225, %s212
        $region24: #{tpu_custom_call.1} parent=15 // pred_fallthru
          _
      $region16: #{tpu_custom_call.1} parent=5 // pred_fallthru
        _
      %p228 = scmp.le.s32.totalorder 1, %s23
      %p229 = scmp.lt.s32.totalorder %s23, 3
      %p230 = pnand %p228, %p229
      %p231 = pneg %p230
      // Predicated region
      $region25: #{tpu_custom_call.1} parent=5 // pred_check
        _
      $region26: #{tpu_custom_call.1} parent=5 // pred_check_branch
        %233 = sbr.rel (%p230) target = $region28
      $region27: #{tpu_custom_call.1} parent=5 // pred_region
        %s234 = ssub.s32 %s23, 1
        %s235 = sand.u32 %s50, 1
        %s236 = scalar_lea.sflag [#allocation3], %s235
        %s237 = sand.u32 %s50, 1
        %s238 = smul.addr %s237, 8
        %s239 = scalar_lea.vmem [#allocation2], %s238
        // Predicated region
        $region29: #{tpu_custom_call.1} parent=27 // pred_check
          %p240 = pneg %p63
        $region30: #{tpu_custom_call.1} parent=27 // pred_check_branch
          %242 = sbr.rel (%p240) target = $region32
        $region31: #{tpu_custom_call.1} parent=27 // pred_region
          %244 = dma.done %s236, 128
        $region32: #{tpu_custom_call.1} parent=27 // pred_fallthru
          _
        %s245 = sand.u32 %s78, 1
        %s246 = scalar_lea.sflag [#allocation6], %s245
        %s247 = sand.u32 %s78, 1
        %s248 = smul.addr %s247, 8
        %s249 = scalar_lea.vmem [#allocation5], %s248
        // Predicated region
        $region33: #{tpu_custom_call.1} parent=27 // pred_check
          %p250 = pneg %p91
        $region34: #{tpu_custom_call.1} parent=27 // pred_check_branch
          %252 = sbr.rel (%p250) target = $region36
        $region35: #{tpu_custom_call.1} parent=27 // pred_region
          %254 = dma.done %s246, 128
        $region36: #{tpu_custom_call.1} parent=27 // pred_fallthru
          _
        %s255 = sand.u32 %s50, 1
        %s256 = scalar_lea.sflag [#allocation3], %s255
        %s257 = sand.u32 %s50, 1
        %s258 = smul.addr %s257, 8
        %s259 = scalar_lea.vmem [#allocation2], %s258
        %p260 = pneg %p63
        %p261 = pneg %p60
        %s262 = sand.u32 %s78, 1
        %s263 = scalar_lea.sflag [#allocation6], %s262
        %s264 = sand.u32 %s78, 1
        %s265 = smul.addr %s264, 8
        %s266 = scalar_lea.vmem [#allocation5], %s265
        %p267 = pneg %p91
        %p268 = pneg %p88
        %p269 = pneg %p117
        %p270 = pneg %p114
        %s271 = sand.u32 %s104, 1
        %s272 = scalar_lea.sflag [#allocation4], %s271
        %s273 = sand.u32 %s104, 1
        %s274 = smul.addr %s273, 8
        %s275 = scalar_lea.vmem [#allocation7], %s274
        %p276 = pneg %p143
        %p277 = pneg %p140
        %s278 = sand.u32 %s28, 1
        %s279 = scalar_lea.sflag [#allocation9], %s278
        %s280 = sand.u32 %s130, 1
        %s281 = smul.addr %s280, 8
        %s282 = scalar_lea.vmem [#allocation8], %s281
        %p283 = pneg %p169
        %p284 = pneg %p166
        %s285 = sand.u32 %s28, 1
        %s286 = scalar_lea.sflag [#allocation9], %s285
        %s287 = sand.u32 %s156, 1
        %s288 = smul.addr %s287, 8
        %s289 = scalar_lea.vmem [#allocation10], %s288
        %p290 = scmp.eq.s32.totalorder %s33, 0
        // Predicated region
        $region37: #{tpu_custom_call.1} parent=27 // pred_check
          %p291 = pneg %p290
        $region38: #{tpu_custom_call.1} parent=27 // pred_check_branch
          %293 = sbr.rel (%p291) target = $region40
        $region39: #{tpu_custom_call.1} parent=27 // pred_region
          %294 = vst [vmem:[%s275] sm:$0xff] 0.0
          %295 = vst [vmem:[%s282] sm:$0xff] 0.0
          %296 = vst [vmem:[%s289] sm:$0xff] 0.0
        $region40: #{tpu_custom_call.1} parent=27 // pred_fallthru
          _
        %v297 = vld [vmem:[%s239] sm:$0xff]
        %v298 = vld [vmem:[%s249] sm:$0xff]
        %v299 = vand.u32 2147483647, %v297
        %v300 = vsub.f32 0.0, %v299
        %v301 = vmul.f32 %v300, 1.442695
        %v302 = vpow.pop %v301
        %v303 = vadd.f32 %v302, 1.0
        %v304 = vlog2.pop %v303
        %v305 = vmul.f32 %v304, 0.6931472
        %v306 = vrcp.pop %v303
        %v307 = vmul.f32 %v303, %v306
        %v308 = vsub.f32 2.0, %v307
        %v309 = vmul.f32 %v306, %v308
        %vm310 = vcmp.ge.f32.partialorder %v297, 0.0
        %v311 = vsub.f32 1.0, %v309
        %v312 = vsel %vm310, %v309, %v311
        %v313 = vmin.f32 %v297, 0.0
        %v314 = vsub.f32 %v313, %v305
        %v315 = vmax.f32 %v314, -13.815511
        %v316 = vmin.f32 %v315, -1.0000005e-06
        %v317 = vsub.f32 0.0, %v297
        %v318 = vmin.f32 %v317, 0.0
        %v319 = vsub.f32 %v318, %v305
        %v320 = vmax.f32 %v319, -13.815511
        %v321 = vmin.f32 %v320, -1.0000005e-06
        %v322 = vmax.f32 %v298, 0.01
        %v323 = vmin.f32 %v322, 0.99
        %v324 = vmul.f32 %v323, -1.0
        %v325 = vmul.f32 %v324, %v316
        %v326 = vsub.f32 1.0, %v323
        %v327 = vmul.f32 %v326, %v321
        %v328 = vsub.f32 %v325, %v327
        %v329 = vmul.f32 %v312, %v298
        %v330 = vand.u32 2147483647, %v298
        %v331 = vadd.f32 %v312, %v330
        %v332 = vld [vmem:[%s275] sm:$0xff]
        %v333 = vadd.f32 %v332, %v329
        %334 = vst [vmem:[%s275] sm:$0xff] %v333
        %v335 = vld [vmem:[%s282] sm:$0xff]
        %v336 = vadd.f32 %v335, %v331
        %337 = vst [vmem:[%s282] sm:$0xff] %v336
        %v338 = vld [vmem:[%s289] sm:$0xff]
        %v339 = vadd.f32 %v338, %v328
        %340 = vst [vmem:[%s289] sm:$0xff] %v339
        %s341 = sand.u32 %s104, 1
        %s342 = scalar_lea.sflag [#allocation4], %s341
        %s343 = sand.u32 %s104, 1
        %s344 = smul.addr %s343, 8
        %s345 = scalar_lea.vmem [#allocation7], %s344
        %s346 = sand.u32 %s28, 1
        %s347 = scalar_lea.sflag [#allocation9], %s346
        %s348 = sand.u32 %s130, 1
        %s349 = smul.addr %s348, 8
        %s350 = scalar_lea.vmem [#allocation8], %s349
        %s351 = sand.u32 %s28, 1
        %s352 = scalar_lea.sflag [#allocation9], %s351
        %s353 = sand.u32 %s156, 1
        %s354 = smul.addr %s353, 8
        %s355 = scalar_lea.vmem [#allocation10], %s354
        // Predicated region
        $region41: #{tpu_custom_call.1} parent=27 // pred_check
          %p356 = pneg %p114
        $region42: #{tpu_custom_call.1} parent=27 // pred_check_branch
          %358 = sbr.rel (%p356) target = $region44
        $region43: #{tpu_custom_call.1} parent=27 // pred_region
          %360 = vsyncadd %s342, 0
          %s361 = smul.addr %s32, 8
          %s362 = scalar_lea.hbm %s2, %s361
          %s364 = sshll.u32 %s345, 4
          %s365 = int_to_ptr.vmem [resolvable:$true] %s364
          %s366 = sshll.u32 %s362, 4
          %s367 = int_to_ptr.hbm [resolvable:$true] %s366
          %369 = dma.vmem_to_hbm [thread:$0]  %s365, 128, %s367, %s342
        $region44: #{tpu_custom_call.1} parent=27 // pred_fallthru
          _
        // Predicated region
        $region45: #{tpu_custom_call.1} parent=27 // pred_check
          %p370 = pneg %p140
        $region46: #{tpu_custom_call.1} parent=27 // pred_check_branch
          %372 = sbr.rel (%p370) target = $region48
        $region47: #{tpu_custom_call.1} parent=27 // pred_region
          %374 = vsyncadd %s347, 0
          %s375 = smul.addr %s32, 8
          %s376 = scalar_lea.hbm %s3, %s375
          %s378 = sshll.u32 %s350, 4
          %s379 = int_to_ptr.vmem [resolvable:$true] %s378
          %s380 = sshll.u32 %s376, 4
          %s381 = int_to_ptr.hbm [resolvable:$true] %s380
          %383 = dma.vmem_to_hbm [thread:$0]  %s379, 128, %s381, %s347
        $region48: #{tpu_custom_call.1} parent=27 // pred_fallthru
          _
        // Predicated region
        $region49: #{tpu_custom_call.1} parent=27 // pred_check
          %p384 = pneg %p166
        $region50: #{tpu_custom_call.1} parent=27 // pred_check_branch
          %386 = sbr.rel (%p384) target = $region52
        $region51: #{tpu_custom_call.1} parent=27 // pred_region
          %388 = vsyncadd %s352, 0
          %s389 = smul.addr %s32, 8
          %s390 = scalar_lea.hbm %s4, %s389
          %s392 = sshll.u32 %s355, 4
          %s393 = int_to_ptr.vmem [resolvable:$true] %s392
          %s394 = sshll.u32 %s390, 4
          %s395 = int_to_ptr.hbm [resolvable:$true] %s394
          %397 = dma.vmem_to_hbm [thread:$0]  %s393, 128, %s395, %s352
        $region52: #{tpu_custom_call.1} parent=27 // pred_fallthru
          _
      $region28: #{tpu_custom_call.1} parent=5 // pred_fallthru
        _
      %p398 = scmp.le.s32.totalorder 2, %s23
      // Predicated region
      $region53: #{tpu_custom_call.1} parent=5 // pred_check
        %p399 = pneg %p398
      $region54: #{tpu_custom_call.1} parent=5 // pred_check_branch
        %401 = sbr.rel (%p399) target = $region56
      $region55: #{tpu_custom_call.1} parent=5 // pred_region
        %s402 = ssub.s32 %s23, 2
        // Predicated region
        $region57: #{tpu_custom_call.1} parent=55 // pred_check
          %p403 = pneg %p120
        $region58: #{tpu_custom_call.1} parent=55 // pred_check_branch
          %405 = sbr.rel (%p403) target = $region60
        $region59: #{tpu_custom_call.1} parent=55 // pred_region
          %s406 = sand.u32 %s105, 1
          %s407 = scalar_lea.sflag [#allocation4], %s406
          %s408 = sand.u32 %s105, 1
          %s409 = smul.addr %s408, 8
          %s410 = scalar_lea.vmem [#allocation7], %s409
          %412 = dma.done %s407, 128
        $region60: #{tpu_custom_call.1} parent=55 // pred_fallthru
          _
        // Predicated region
        $region61: #{tpu_custom_call.1} parent=55 // pred_check
          %p413 = pneg %p146
        $region62: #{tpu_custom_call.1} parent=55 // pred_check_branch
          %415 = sbr.rel (%p413) target = $region64
        $region63: #{tpu_custom_call.1} parent=55 // pred_region
          %s416 = sand.u32 %s29, 1
          %s417 = scalar_lea.sflag [#allocation9], %s416
          %s418 = sand.u32 %s131, 1
          %s419 = smul.addr %s418, 8
          %s420 = scalar_lea.vmem [#allocation8], %s419
          %422 = dma.done %s417, 128
        $region64: #{tpu_custom_call.1} parent=55 // pred_fallthru
          _
        // Predicated region
        $region65: #{tpu_custom_call.1} parent=55 // pred_check
          %p423 = pneg %p172
        $region66: #{tpu_custom_call.1} parent=55 // pred_check_branch
          %425 = sbr.rel (%p423) target = $region68
        $region67: #{tpu_custom_call.1} parent=55 // pred_region
          %s426 = sand.u32 %s29, 1
          %s427 = scalar_lea.sflag [#allocation9], %s426
          %s428 = sand.u32 %s157, 1
          %s429 = smul.addr %s428, 8
          %s430 = scalar_lea.vmem [#allocation10], %s429
          %432 = dma.done %s427, 128
        $region68: #{tpu_custom_call.1} parent=55 // pred_fallthru
          _
      $region56: #{tpu_custom_call.1} parent=5 // pred_fallthru
        _
    $region6: #{tpu_custom_call.1} parent=1 // loop_footer
      %s27 = sadd.s32 1, %s23
    $region7: #{tpu_custom_call.1} parent=1 // loop_footer_branch
      %22 = sbr.rel target = $region3
    $region8: #{tpu_custom_call.1} parent=1 // loop_exit
      _
    %433 = vsyncpa [#allocation3], 1
    %s434 = scalar_lea.sflag [#allocation3], 1
    %435 = vsyncpa %s434, 1
    %436 = vsyncpa [#allocation6], 1
    %s437 = scalar_lea.sflag [#allocation6], 1
    %438 = vsyncpa %s437, 1
    %439 = vsyncpa [#allocation4], 1
    %s440 = scalar_lea.sflag [#allocation4], 1
    %441 = vsyncpa %s440, 1
    %442 = vsyncpa [#allocation9], 1
    %s443 = scalar_lea.sflag [#allocation9], 1
    %444 = vsyncpa %s443, 1

</llo_original>
